<compile_context>
chip_gen: v6e
topology: v6e:2x2x1
jax: 0.10.0
libtpu: 0.0.40
codegen_flags: <defaults>
</compile_context>

<pallas_src>
import jax
import jax.numpy as jnp
from jax.experimental import pallas as pl
from jax.experimental.pallas import tpu as pltpu


def _round_up(x, m):
    return ((x + m - 1) // m) * m


def _qmixture_kernel(w_ref, *refs):
    """Weighted sum over modalities for one (TG, TK) tile.

    w_ref:      VMEM [M, TG, 1]   per-row mixture weights (lane-broadcast)
    refs[:-1]:  M x VMEM [TG, TK] per-modality data (lane-dense)
    refs[-1]:   VMEM [TG, TK]     output
    """
    x_refs, o_ref = refs[:-1], refs[-1]
    acc = x_refs[0][...].astype(jnp.float32) * w_ref[0].astype(jnp.float32)
    # M is small and static -> unrolled weighted accumulation on the VPU.
    for m in range(1, len(x_refs)):
        acc = acc + x_refs[m][...].astype(jnp.float32) * w_ref[m].astype(jnp.float32)
    o_ref[...] = acc.astype(o_ref.dtype)


def _vmem_budget():
    """Generation-aware scoped-VMEM limit and pipeline working-set target."""
    try:
        cap = int(pltpu.get_tpu_info().vmem_capacity_bytes)
    except Exception:
        cap = 64 * 1024 * 1024                          # conservative (v7x-sized)
    vmem_limit = min(cap // 2, 64 * 1024 * 1024)        # 64 MiB v5e/v6e, 32 MiB v7x
    return vmem_limit, (vmem_limit * 3) // 4            # leave headroom in the limit


def qmixture_pallas(xs, w):
    """xs: list of M arrays [G, K]; w: [M, G, 1] -> out[g, k] = sum_m xs[m][g,k]*w[m,g,0]."""
    M = len(xs)
    G, K = xs[0].shape
    dtype = xs[0].dtype
    itemsize = jnp.dtype(dtype).itemsize
    w_itemsize = jnp.dtype(w.dtype).itemsize

    vmem_limit, budget = _vmem_budget()

    # ---- K tile -------------------------------------------------------------
    # Prefer the full K extent (single K step; unmasked lane-dense stores when
    # K % 128 == 0).  Only tile K (128-multiples) when even a TG=8 block of the
    # full K would blow the VMEM budget.  A non-128-multiple K must be a
    # full-extent block anyway (masked stores on the last partial vreg only).
    full_k_bytes = 2 * (M + 1) * K * itemsize * 8       # double-buffered, TG floor 8
    if K % 128 != 0 or full_k_bytes <= budget:
        TK = K
    else:
        tk_max = budget // (2 * (M + 1) * itemsize * 8)
        TK = min(K, max(128, (tk_max // 128) * 128))

    # ---- G tile -------------------------------------------------------------
    # Largest multiple of 8 whose double-buffered (inputs + output) working set
    # fits the budget (accounted at actual itemsize; the f32 accumulator lives
    # in vregs, not VMEM), capped so the G axis keeps >= ~4 grid steps when G
    # is large (v7x megacore occupancy + pipeline overlap).
    bytes_per_row = 2 * ((M + 1) * TK * itemsize + M * w_itemsize)
    tg_budget = max(8, (budget // bytes_per_row) // 8 * 8)
    tg_steps = max(8, _round_up(pl.cdiv(G, 4), 8))
    TG = max(8, min(tg_budget, tg_steps, _round_up(G, 8)))

    grid = (pl.cdiv(G, TG), pl.cdiv(K, TK))

    in_specs = [pl.BlockSpec((M, TG, 1), lambda g, k: (0, g, 0))]
    in_specs += [pl.BlockSpec((TG, TK), lambda g, k: (g, k)) for _ in range(M)]
    out_specs = pl.BlockSpec((TG, TK), lambda g, k: (g, k))

    cost = pl.CostEstimate(
        flops=2 * M * G * K,
        transcendentals=0,
        bytes_accessed=(M + 1) * G * K * itemsize + M * G * w_itemsize,
    )

    return pl.pallas_call(
        _qmixture_kernel,
        out_shape=jax.ShapeDtypeStruct((G, K), dtype),
        grid_spec=pltpu.PrefetchScalarGridSpec(
            num_scalar_prefetch=0,
            grid=grid,
            in_specs=in_specs,
            out_specs=out_specs,
        ),
        compiler_params=pltpu.CompilerParams(
            dimension_semantics=("parallel", "parallel"),
            vmem_limit_bytes=vmem_limit,
        ),
        cost_estimate=cost,
    )(w, *xs)


class QMixture:
    """JAX/Pallas port of the PyTorch QMixture module (no parameters)."""

    def __init__(self, use_weights=True):
        self.use_weights = use_weights

    def __call__(self, inputs):
        if not isinstance(inputs, list):
            raise ValueError('This layer should be called on a list of 2 inputs.')
        if len(inputs) != 2:
            raise ValueError('This layer should be called on a list of 2 inputs.'
                             'Got ' + str(len(inputs)) + ' inputs.')
        in_modalities, weights = inputs
        M = len(in_modalities)
        T = len(in_modalities[0])
        F = len(in_modalities[0][0])
        B, E, _ = in_modalities[0][0][0].shape

        # Per-modality pack [T, B, F, E, E] -> [T*B, F*E*E]; the reshape is a
        # free (contiguous) view and there is NO stack over modalities — they
        # go to the kernel as M separate operands.
        # TODO(synk): the per-modality stack over (T, F) is still one HBM copy
        # forced by the list-of-tensors interface; a dense [T,B,F,E,E] input
        # per modality (or allow_input_fusion) would remove it entirely.
        xs = []
        for m in range(M):
            xm = jnp.stack(
                [jnp.stack(in_modalities[m][t], axis=1) for t in range(T)],
                axis=0)                                   # [T, B, F, E, E]
            xs.append(xm.reshape(T * B, F * E * E))

        # weights [B, T, M] -> [M, T*B, 1] with row index g = t*B + b
        # (matches weights.transpose(0, 1) in the torch reference).
        w = jnp.transpose(weights, (2, 1, 0)).reshape(M, T * B, 1)

        out = qmixture_pallas(xs, w)                      # [T*B, F*E*E]
        out = out.reshape(T, B, F, E, E)
        return [[out[t, :, f] for f in range(F)] for t in range(T)]


def _reference(in_modalities, weights):
    """Pure-JAX reference matching the PyTorch forward."""
    M = len(in_modalities)
    T = len(in_modalities[0])
    F = len(in_modalities[0][0])
    outs = []
    for t in range(T):
        fields = []
        for f in range(F):
            acc = jnp.zeros_like(in_modalities[0][t][f])
            for m in range(M):
                acc = acc + in_modalities[m][t][f] * weights[:, t, m][:, None, None]
            fields.append(acc)
        outs.append(fields)
    return outs


if __name__ == "__main__":
    key = jax.random.PRNGKey(0)
    B, E, M, T, F = 2, 16, 3, 4, 2   # batch, embed_dim, modalities, timesteps, fields

    # Deterministic inputs: per-(modality, timestep, field) density-matrix-like
    # tensors [B, E, E] and softmax mixture weights [B, T, M].
    keys = jax.random.split(key, M * T * F + 1)
    in_modalities = []
    idx = 0
    for m in range(M):
        steps = []
        for t in range(T):
            fields = []
            for f in range(F):
                fields.append(jax.random.normal(keys[idx], (B, E, E), jnp.float32))
                idx += 1
            steps.append(fields)
        in_modalities.append(steps)
    weights = jax.nn.softmax(
        jax.random.normal(keys[idx], (B, T, M), jnp.float32), axis=-1)

    layer = QMixture(use_weights=True)
    outputs = layer([in_modalities, weights])
    jax.block_until_ready(outputs)

    # Correctness check against the pure-JAX reference.
    ref = _reference(in_modalities, weights)
    for t in range(T):
        for f in range(F):
            assert outputs[t][f].shape == (B, E, E)
            if not jnp.allclose(outputs[t][f], ref[t][f], atol=1e-5, rtol=1e-5):
                raise AssertionError(f"mismatch at t={t}, f={f}")

    print("KERNEL_OK")
</pallas_src>

<mosaic_0001>
module attributes {stable_mosaic.version = 11 : i64} {
  func.func @_qmixture_kernel(%arg0: i32, %arg1: i32, %arg2: memref<3x8x1xf32, #tpu.memory_space<vmem>>, %arg3: memref<8x512xf32, #tpu.memory_space<vmem>>, %arg4: memref<8x512xf32, #tpu.memory_space<vmem>>, %arg5: memref<8x512xf32, #tpu.memory_space<vmem>>, %arg6: memref<8x512xf32, #tpu.memory_space<vmem>>) attributes {dimension_semantics = [#tpu.dimension_semantics<parallel>, #tpu.dimension_semantics<parallel>], iteration_bounds = array<i64: 1, 1>, scalar_prefetch = 0 : i64, scratch_operands = 0 : i64, tpu.core_type = #tpu.core_type<tc>, window_params = [{transform_indices = @transform_0, window_bounds = array<i64: 3, 8, 1>}, {transform_indices = @transform_1, window_bounds = array<i64: 8, 512>}, {transform_indices = @transform_2, window_bounds = array<i64: 8, 512>}, {transform_indices = @transform_3, window_bounds = array<i64: 8, 512>}, {transform_indices = @transform_4, window_bounds = array<i64: 8, 512>}]} {
    %c0 = arith.constant 0 : index
    %c0_0 = arith.constant 0 : index
    %0 = vector.load %arg3[%c0, %c0_0] : memref<8x512xf32, #tpu.memory_space<vmem>>, vector<8x512xf32>
    %c0_1 = arith.constant 0 : index
    %c0_2 = arith.constant 0 : index
    %c0_3 = arith.constant 0 : index
    %1 = vector.load %arg2[%c0_1, %c0_2, %c0_3] : memref<3x8x1xf32, #tpu.memory_space<vmem>>, vector<1x8x1xf32>
    %2 = vector.shape_cast %1 : vector<1x8x1xf32> to vector<8x1xf32>
    %3 = vector.broadcast %2 : vector<8x1xf32> to vector<8x512xf32>
    %4 = arith.mulf %0, %3 : vector<8x512xf32>
    %c0_4 = arith.constant 0 : index
    %c0_5 = arith.constant 0 : index
    %5 = vector.load %arg4[%c0_4, %c0_5] : memref<8x512xf32, #tpu.memory_space<vmem>>, vector<8x512xf32>
    %c1 = arith.constant 1 : index
    %c0_6 = arith.constant 0 : index
    %c0_7 = arith.constant 0 : index
    %6 = vector.load %arg2[%c1, %c0_6, %c0_7] : memref<3x8x1xf32, #tpu.memory_space<vmem>>, vector<1x8x1xf32>
    %7 = vector.shape_cast %6 : vector<1x8x1xf32> to vector<8x1xf32>
    %8 = vector.broadcast %7 : vector<8x1xf32> to vector<8x512xf32>
    %9 = arith.mulf %5, %8 : vector<8x512xf32>
    %10 = arith.addf %4, %9 : vector<8x512xf32>
    %c0_8 = arith.constant 0 : index
    %c0_9 = arith.constant 0 : index
    %11 = vector.load %arg5[%c0_8, %c0_9] : memref<8x512xf32, #tpu.memory_space<vmem>>, vector<8x512xf32>
    %c2 = arith.constant 2 : index
    %c0_10 = arith.constant 0 : index
    %c0_11 = arith.constant 0 : index
    %12 = vector.load %arg2[%c2, %c0_10, %c0_11] : memref<3x8x1xf32, #tpu.memory_space<vmem>>, vector<1x8x1xf32>
    %13 = vector.shape_cast %12 : vector<1x8x1xf32> to vector<8x1xf32>
    %14 = vector.broadcast %13 : vector<8x1xf32> to vector<8x512xf32>
    %15 = arith.mulf %11, %14 : vector<8x512xf32>
    %16 = arith.addf %10, %15 : vector<8x512xf32>
    %c0_12 = arith.constant 0 : index
    %c0_13 = arith.constant 0 : index
    %17 = vector.load %arg6[%c0_12, %c0_13] : memref<8x512xf32, #tpu.memory_space<vmem>>, vector<8x512xf32>
    tpu.vector_store %arg6[%c0_12, %c0_13], %16 {strides = array<i32>} : memref<8x512xf32, #tpu.memory_space<vmem>>, vector<8x512xf32>,
    return
  }
  func.func @transform_0(%arg0: i32, %arg1: i32) -> (i32, i32, i32) {
    %c0_i32 = arith.constant 0 : i32
    %c0_i32_0 = arith.constant 0 : i32
    %c0_i32_1 = arith.constant 0 : i32
    return %c0_i32, %arg0, %c0_i32_0 : i32, i32, i32
  }
  func.func @transform_1(%arg0: i32, %arg1: i32) -> (i32, i32) {
    %c0_i32 = arith.constant 0 : i32
    return %arg0, %arg1 : i32, i32
  }
  func.func @transform_2(%arg0: i32, %arg1: i32) -> (i32, i32) {
    %c0_i32 = arith.constant 0 : i32
    return %arg0, %arg1 : i32, i32
  }
  func.func @transform_3(%arg0: i32, %arg1: i32) -> (i32, i32) {
    %c0_i32 = arith.constant 0 : i32
    return %arg0, %arg1 : i32, i32
  }
  func.func @transform_4(%arg0: i32, %arg1: i32) -> (i32, i32) {
    %c0_i32 = arith.constant 0 : i32
    return %arg0, %arg1 : i32, i32
  }
}

</mosaic_0001>

<llo_original>
// kernel: tpu_custom_call.1
$region0: #{tpu_custom_call.1}
  #allocation0 [shape = 'u32[]', space=smem, size = 0x4, offset = 0x4, fixed_abs, tag = 'smem constant byte address 0x4 - core index']
  #allocation1 [shape = 'u32[144,128]{1,0:T(1,128)}', space=vmem, size = 0x12000, scoped, tag = 'internal scratch']
  %s0 = inlined_call_operand.vmem [shape: f32[3,8,1], index: 0, kind: input, shape index: {}]
  %s1 = inlined_call_operand.hbm [shape: f32[8,512], index: 1, kind: input, shape index: {}]
  %s2 = inlined_call_operand.hbm [shape: f32[8,512], index: 2, kind: input, shape index: {}]
  %s3 = inlined_call_operand.vmem [shape: f32[8,512], index: 3, kind: input, shape index: {}]
  %s4 = inlined_call_operand.hbm [shape: f32[8,512], index: 4, kind: output, shape index: {}]
  %s5 = sld [smem:[#allocation0]]
  $region34: #{tpu_custom_call.1} parent=0
    _
  %s7 = ssub.s32 1, %s5
  %s8 = scalar_select 0, %s7, %s5
  $region1: #{tpu_custom_call.1} parent=0
    #allocation2 [shape = 'u8[16384]{0}', space=vmem, size = 0x4000, scoped, tag = 'input window, operand 1, single buffered']
    #allocation3 [shape = 's32[1]{0}', space=sflag, size = 0x4, scoped, tag = 'scoped memory for tpu_custom_call.1']
    #allocation4 [shape = 's32[1]{0}', space=sflag, size = 0x4, scoped, tag = 'scoped memory for tpu_custom_call.1']
    #allocation5 [shape = 'u8[16384]{0}', space=vmem, size = 0x4000, scoped, tag = 'input window, operand 2, single buffered']
    #allocation6 [shape = 's32[1]{0}', space=sflag, size = 0x4, scoped, tag = 'scoped memory for tpu_custom_call.1']
    #allocation7 [shape = 'u8[16384]{0}', space=vmem, size = 0x4000, scoped, tag = 'output window, operand 0, single buffered']
    %9 = vsyncpa [#allocation3], 0
    %10 = vsyncpa [#allocation6], 0
    %11 = vsyncpa [#allocation4], 0
    // Predicated region
    $region2: #{tpu_custom_call.1} parent=1 // pred_check
      _
    $region3: #{tpu_custom_call.1} parent=1 // pred_check_branch
      %13 = sbr.rel (0) target = $region5
    $region4: #{tpu_custom_call.1} parent=1 // pred_region
      _
    $region5: #{tpu_custom_call.1} parent=1 // pred_fallthru
      _
    // Predicated region
    $region6: #{tpu_custom_call.1} parent=1 // pred_check
      _
    $region7: #{tpu_custom_call.1} parent=1 // pred_check_branch
      %15 = sbr.rel (0) target = $region9
    $region8: #{tpu_custom_call.1} parent=1 // pred_region
      %s17 = ssub.s32 512, 512
      %18 = vsyncadd [#allocation3], %s17
      %s20 = sshll.u32 [#allocation2], 4
      %s21 = int_to_ptr.vmem [resolvable:$true] %s20
      %23 = dma.hbm_to_vmem [thread:$0]  %s1, 512, %s21, [#allocation3]
    $region9: #{tpu_custom_call.1} parent=1 // pred_fallthru
      _
    // Predicated region
    $region10: #{tpu_custom_call.1} parent=1 // pred_check
      _
    $region11: #{tpu_custom_call.1} parent=1 // pred_check_branch
      %25 = sbr.rel (0) target = $region13
    $region12: #{tpu_custom_call.1} parent=1 // pred_region
      %s27 = ssub.s32 512, 512
      %28 = vsyncadd [#allocation6], %s27
      %s30 = sshll.u32 [#allocation5], 4
      %s31 = int_to_ptr.vmem [resolvable:$true] %s30
      %33 = dma.hbm_to_vmem [thread:$0]  %s2, 512, %s31, [#allocation6]
    $region13: #{tpu_custom_call.1} parent=1 // pred_fallthru
      _
    // Predicated region
    $region14: #{tpu_custom_call.1} parent=1 // pred_check
      _
    $region15: #{tpu_custom_call.1} parent=1 // pred_check_branch
      %35 = sbr.rel (0) target = $region17
    $region16: #{tpu_custom_call.1} parent=1 // pred_region
      _
    $region17: #{tpu_custom_call.1} parent=1 // pred_fallthru
      _
    // Predicated region
    $region18: #{tpu_custom_call.1} parent=1 // pred_check
      _
    $region19: #{tpu_custom_call.1} parent=1 // pred_check_branch
      %37 = sbr.rel (0) target = $region21
    $region20: #{tpu_custom_call.1} parent=1 // pred_region
      %38 = dma.done [#allocation3], 512
    $region21: #{tpu_custom_call.1} parent=1 // pred_fallthru
      _
    // Predicated region
    $region22: #{tpu_custom_call.1} parent=1 // pred_check
      _
    $region23: #{tpu_custom_call.1} parent=1 // pred_check_branch
      %40 = sbr.rel (0) target = $region25
    $region24: #{tpu_custom_call.1} parent=1 // pred_region
      %41 = dma.done [#allocation6], 512
    $region25: #{tpu_custom_call.1} parent=1 // pred_fallthru
      _
    %v42 = vld [vmem:[#allocation2] sm:$0xff]
    %v43 = vld [vmem:[#allocation2 + $0x8] sm:$0xff]
    %v44 = vld [vmem:[#allocation2 + $0x10] sm:$0xff]
    %v45 = vld [vmem:[#allocation2 + $0x18] sm:$0xff]
    %v46 = vld [vmem:[%s0] sm:$0xff]
    %48 = vset.pattern.permute.xlu0 0
    %49 = vperm.xlu0 %48, %v46
    %v50 = vpop.permute.xlu0 %49
    %v52 = vmul.f32 %v42, %v50
    %v53 = vmul.f32 %v43, %v50
    %v54 = vmul.f32 %v44, %v50
    %v55 = vmul.f32 %v45, %v50
    %v56 = vld [vmem:[#allocation5] sm:$0xff]
    %v57 = vld [vmem:[#allocation5 + $0x8] sm:$0xff]
    %v58 = vld [vmem:[#allocation5 + $0x10] sm:$0xff]
    %v59 = vld [vmem:[#allocation5 + $0x18] sm:$0xff]
    %s60 = scalar_lea.vmem %s0, 8
    %v61 = vld [vmem:[%s60] sm:$0xff]
    %63 = vset.pattern.permute.xlu0 0
    %64 = vperm.xlu0 %63, %v61
    %v65 = vpop.permute.xlu0 %64
    %v67 = vmul.f32 %v56, %v65
    %v68 = vmul.f32 %v57, %v65
    %v69 = vmul.f32 %v58, %v65
    %v70 = vmul.f32 %v59, %v65
    %v71 = vadd.f32 %v52, %v67
    %v72 = vadd.f32 %v53, %v68
    %v73 = vadd.f32 %v54, %v69
    %v74 = vadd.f32 %v55, %v70
    %v75 = vld [vmem:[%s3] sm:$0xff]
    %v76 = vld [vmem:[%s3 + $0x8] sm:$0xff]
    %v77 = vld [vmem:[%s3 + $0x10] sm:$0xff]
    %v78 = vld [vmem:[%s3 + $0x18] sm:$0xff]
    %s79 = scalar_lea.vmem %s0, 16
    %v80 = vld [vmem:[%s79] sm:$0xff]
    %82 = vset.pattern.permute.xlu0 0
    %83 = vperm.xlu0 %82, %v80
    %v84 = vpop.permute.xlu0 %83
    %v86 = vmul.f32 %v75, %v84
    %v87 = vmul.f32 %v76, %v84
    %v88 = vmul.f32 %v77, %v84
    %v89 = vmul.f32 %v78, %v84
    %v90 = vadd.f32 %v71, %v86
    %v91 = vadd.f32 %v72, %v87
    %v92 = vadd.f32 %v73, %v88
    %v93 = vadd.f32 %v74, %v89
    %94 = vst [vmem:[#allocation7] sm:$0xff] %v90
    %95 = vst [vmem:[#allocation7 + $0x8] sm:$0xff] %v91
    %96 = vst [vmem:[#allocation7 + $0x10] sm:$0xff] %v92
    %97 = vst [vmem:[#allocation7 + $0x18] sm:$0xff] %v93
    // Predicated region
    $region26: #{tpu_custom_call.1} parent=1 // pred_check
      _
    $region27: #{tpu_custom_call.1} parent=1 // pred_check_branch
      %99 = sbr.rel (0) target = $region29
    $region28: #{tpu_custom_call.1} parent=1 // pred_region
      %s101 = ssub.s32 512, 512
      %102 = vsyncadd [#allocation4], %s101
      %s104 = sshll.u32 [#allocation7], 4
      %s105 = int_to_ptr.vmem [resolvable:$true] %s104
      %107 = dma.vmem_to_hbm [thread:$0]  %s105, 512, %s4, [#allocation4]
    $region29: #{tpu_custom_call.1} parent=1 // pred_fallthru
      _
    // Predicated region
    $region30: #{tpu_custom_call.1} parent=1 // pred_check
      _
    $region31: #{tpu_custom_call.1} parent=1 // pred_check_branch
      %109 = sbr.rel (0) target = $region33
    $region32: #{tpu_custom_call.1} parent=1 // pred_region
      %110 = dma.done [#allocation4], 512
    $region33: #{tpu_custom_call.1} parent=1 // pred_fallthru
      _
    %111 = vsyncpa [#allocation3], 1
    %112 = vsyncpa [#allocation6], 1
    %113 = vsyncpa [#allocation4], 1

</llo_original>
